<compile_context>
chip_gen: v6e
topology: v6e:2x2x1
jax: 0.10.0
libtpu: 0.0.40
codegen_flags: <defaults>
</compile_context>

<pallas_src>
import math
import functools

import jax
import jax.numpy as jnp
from jax.experimental import pallas as pl
from jax.experimental.pallas import tpu as pltpu

_LANE = 128


def _mha_attn_kernel(q_ref, kT_ref, adj_ref, out_ref, *, n_edges, n_valid):
    # q_ref:   (1, 1, E, TQ, Dkp)   bf16  per-(batch, head) query tile, scale folded in
    # kT_ref:  (1, 1, E, Dkp, Npad) bf16  per-(batch, head) keys, pre-transposed
    # adj_ref: (1, TQ, Npad)        int8  edge-type labels for this query-row tile
    # out_ref: (1, 1, TQ, Npad)     f32   attention probabilities
    adj = adj_ref[0].astype(jnp.int32)          # one unpack per tile, reused per edge
    tq, n_pad = adj.shape

    scores = jnp.zeros((tq, n_pad), jnp.float32)
    for e in range(n_edges):                    # small static edge count -> unrolled
        s = jnp.dot(q_ref[0, 0, e], kT_ref[0, 0, e],
                    preferred_element_type=jnp.float32)       # (TQ, Npad) QK^T on MXU
        # Edge labels are mutually exclusive -> select, don't add.
        scores = jnp.where(adj == (e + 1), s, scores)

    # masked_fill(scores == 0, -1e9) -- inherited module semantics.
    scores = jnp.where(scores == 0.0, jnp.float32(-1.0e9), scores)
    # TODO(synk): dropout on scores is identity at p=0.0 / eval mode; not implemented.

    m = jnp.max(scores, axis=-1, keepdims=True)
    p = jnp.exp(scores - m)
    # Zero padded key columns so padding never changes the softmax result
    # (matters when a whole row is -1e9, i.e. a node with no edges).
    col = jax.lax.broadcasted_iota(jnp.int32, (tq, n_pad), 1)
    p = jnp.where(col < n_valid, p, 0.0)
    denom = jnp.sum(p, axis=-1, keepdims=True)
    out_ref[0, 0] = (p * pl.reciprocal(denom, approx=True)).astype(out_ref.dtype)


def multi_head_dot_product_attention(h, adj_mat, wq, bq, wk, bk, n_heads, *, tile_q=_LANE):
    """h: (N_bt, N, F_in); adj_mat: (N_bt, N, N) int edge labels (0 = no edge);
       wq/wk: (E, F_out, F_in); bq/bk: (E, F_out).
       Returns (n_heads, N_bt, N, N) float32 attention (== module output)."""
    n_bt, n_nodes, f_in = h.shape
    n_edges, f_out, _ = wq.shape
    d_k = f_out // n_heads
    scale = 1.0 / math.sqrt(d_k)

    n_pad = ((n_nodes + tile_q - 1) // tile_q) * tile_q   # lane-dense output stores
    d_k_p = ((d_k + 15) // 16) * 16                       # bf16 sublane-aligned contraction
    n_qt = n_pad // tile_q

    # --- hoisted projections (tiny XLA einsums, f32) -------------------------------
    h32 = h.astype(jnp.float32)
    q = jnp.einsum('bnf,eof->beno', h32, wq.astype(jnp.float32)) + bq[None, :, None, :]
    k = jnp.einsum('bnf,eof->beno', h32, wk.astype(jnp.float32)) + bk[None, :, None, :]
    q = q.reshape(n_bt, n_edges, n_nodes, n_heads, d_k) * scale   # fold 1/sqrt(d_k) in f32
    k = k.reshape(n_bt, n_edges, n_nodes, n_heads, d_k)
    q = jnp.transpose(q, (0, 3, 1, 2, 4))       # (B, H, E, N, d_k)
    kT = jnp.transpose(k, (0, 3, 1, 4, 2))      # (B, H, E, d_k, N)  pre-transposed keys
    q = jnp.pad(q, ((0, 0), (0, 0), (0, 0),
                    (0, n_pad - n_nodes), (0, d_k_p - d_k))).astype(jnp.bfloat16)
    kT = jnp.pad(kT, ((0, 0), (0, 0), (0, 0),
                      (0, d_k_p - d_k), (0, n_pad - n_nodes))).astype(jnp.bfloat16)

    adj_p = jnp.pad(adj_mat.astype(jnp.int8),
                    ((0, 0), (0, n_pad - n_nodes), (0, n_pad - n_nodes)))

    kernel = functools.partial(_mha_attn_kernel, n_edges=n_edges, n_valid=n_nodes)

    # Explicit scoped-VMEM budget: double-buffered blocks + f32 score/exp temps.
    blk_bytes = 2 * (n_edges * tile_q * d_k_p * 2        # q block (bf16)
                     + n_edges * d_k_p * n_pad * 2       # kT block (bf16)
                     + tile_q * n_pad * 1                # adj block (int8)
                     + tile_q * n_pad * 4)               # out block (f32)
    temp_bytes = 8 * tile_q * n_pad * 4
    vmem_limit = int(min(64 * 2**20, max(16 * 2**20, blk_bytes + temp_bytes + (2 << 20))))

    out = pl.pallas_call(
        kernel,
        out_shape=jax.ShapeDtypeStruct((n_heads, n_bt, n_pad, n_pad), jnp.float32),
        # head innermost -> adj block index constant across consecutive steps (DMA skipped)
        grid=(n_bt, n_qt, n_heads),
        in_specs=[
            pl.BlockSpec((1, 1, n_edges, tile_q, d_k_p),
                         lambda b, qt, hh: (b, hh, 0, qt, 0)),
            pl.BlockSpec((1, 1, n_edges, d_k_p, n_pad),
                         lambda b, qt, hh: (b, hh, 0, 0, 0)),
            pl.BlockSpec((1, tile_q, n_pad),
                         lambda b, qt, hh: (b, qt, 0)),
        ],
        out_specs=pl.BlockSpec((1, 1, tile_q, n_pad),
                               lambda b, qt, hh: (hh, b, qt, 0)),
        compiler_params=pltpu.CompilerParams(
            dimension_semantics=("parallel", "parallel", "arbitrary"),
            vmem_limit_bytes=vmem_limit),
    )(q, kT, adj_p)

    return out[:, :, :n_nodes, :n_nodes]


def _reference(h, adj_mat, wq, bq, wk, bk, n_heads):
    # Pure-JAX f32 mirror of the PyTorch forward (for correctness checking).
    n_bt, n, _ = h.shape
    n_edges, f_out, _ = wq.shape
    d_k = f_out // n_heads
    adj = adj_mat[:, None, :, :]
    scores = jnp.zeros((n_bt, n_heads, n, n), jnp.float32)
    for e in range(n_edges):
        q = h @ wq[e].T + bq[e]
        k = h @ wk[e].T + bk[e]
        q = q.reshape(n_bt, n, n_heads, d_k).transpose(0, 2, 1, 3)
        k = k.reshape(n_bt, n, n_heads, d_k).transpose(0, 2, 1, 3)
        s = jnp.einsum('bhnd,bhmd->bhnm', q, k) / math.sqrt(d_k)
        scores = scores + jnp.where(adj != (e + 1), 0.0, s)
    scores = jnp.where(scores == 0.0, -1.0e9, scores)
    attn = jax.nn.softmax(scores, axis=-1)
    return jnp.transpose(attn, (1, 0, 2, 3))


if __name__ == "__main__":
    # Small shapes consistent with the module's forward.
    N_BT, N_NODES = 2, 16
    IN_FEATURES, OUT_FEATURES, N_HEADS = 8, 32, 4
    EDGES = [1, 2]                 # len(edges) == number of edge types
    N_EDGES = len(EDGES)

    key = jax.random.PRNGKey(0)
    k_h, k_adj, k_wq, k_bq, k_wk, k_bk = jax.random.split(key, 6)

    h = jax.random.normal(k_h, (N_BT, N_NODES, IN_FEATURES), dtype=jnp.float32)
    # Edge-type labels in {0, 1, ..., N_EDGES}; 0 means "no edge".
    adj_mat = jax.random.randint(k_adj, (N_BT, N_NODES, N_NODES), 0, N_EDGES + 1,
                                 dtype=jnp.int32)

    # Parameters shaped like nn.Linear(in_features, out_features) per edge type.
    wq = 0.1 * jax.random.normal(k_wq, (N_EDGES, OUT_FEATURES, IN_FEATURES), jnp.float32)
    bq = 0.1 * jax.random.normal(k_bq, (N_EDGES, OUT_FEATURES), jnp.float32)
    wk = 0.1 * jax.random.normal(k_wk, (N_EDGES, OUT_FEATURES, IN_FEATURES), jnp.float32)
    bk = 0.1 * jax.random.normal(k_bk, (N_EDGES, OUT_FEATURES), jnp.float32)

    out = multi_head_dot_product_attention(h, adj_mat, wq, bq, wk, bk, N_HEADS)
    out = jax.block_until_ready(out)

    ref = jax.block_until_ready(_reference(h, adj_mat, wq, bq, wk, bk, N_HEADS))
    assert out.shape == (N_HEADS, N_BT, N_NODES, N_NODES)
    # bf16 MXU operands (f32 accumulation) + approx reciprocal -> relaxed tolerance.
    assert jnp.allclose(out, ref, atol=2e-2, rtol=2e-2), float(jnp.max(jnp.abs(out - ref)))

    print("KERNEL_OK")
</pallas_src>

<mosaic_0001>
module attributes {stable_mosaic.version = 11 : i64} {
  func.func @_mha_attn_kernel(%arg0: i32, %arg1: i32, %arg2: i32, %arg3: memref<1x1x2x128x16xbf16, #tpu.memory_space<vmem>>, %arg4: memref<1x1x2x16x128xbf16, #tpu.memory_space<vmem>>, %arg5: memref<1x128x128xi8, #tpu.memory_space<vmem>>, %arg6: memref<1x1x128x128xf32, #tpu.memory_space<vmem>>) attributes {dimension_semantics = [#tpu.dimension_semantics<parallel>, #tpu.dimension_semantics<parallel>, #tpu.dimension_semantics<arbitrary>], iteration_bounds = array<i64: 2, 1, 4>, scalar_prefetch = 0 : i64, scratch_operands = 0 : i64, tpu.core_type = #tpu.core_type<tc>, window_params = [{transform_indices = @transform_0, window_bounds = array<i64: 1, 1, 2, 128, 16>}, {transform_indices = @transform_1, window_bounds = array<i64: 1, 1, 2, 16, 128>}, {transform_indices = @transform_2, window_bounds = array<i64: 1, 128, 128>}, {transform_indices = @transform_3, window_bounds = array<i64: 1, 1, 128, 128>}]} {
    %c0 = arith.constant 0 : index
    %c0_0 = arith.constant 0 : index
    %c0_1 = arith.constant 0 : index
    %0 = vector.load %arg5[%c0, %c0_0, %c0_1] : memref<1x128x128xi8, #tpu.memory_space<vmem>>, vector<1x128x128xi8>
    %1 = vector.shape_cast %0 : vector<1x128x128xi8> to vector<128x128xi8>
    %2 = arith.extsi %1 : vector<128x128xi8> to vector<128x128xi32>
    %cst = arith.constant 0.000000e+00 : f32
    %3 = vector.broadcast %cst : f32 to vector<128x128xf32>
    %c0_2 = arith.constant 0 : index
    %c0_3 = arith.constant 0 : index
    %c0_4 = arith.constant 0 : index
    %c0_5 = arith.constant 0 : index
    %c0_6 = arith.constant 0 : index
    %4 = vector.load %arg3[%c0_2, %c0_3, %c0_4, %c0_5, %c0_6] : memref<1x1x2x128x16xbf16, #tpu.memory_space<vmem>>, vector<1x1x1x128x16xbf16>
    %5 = vector.shape_cast %4 : vector<1x1x1x128x16xbf16> to vector<128x16xbf16>
    %c0_7 = arith.constant 0 : index
    %c0_8 = arith.constant 0 : index
    %c0_9 = arith.constant 0 : index
    %c0_10 = arith.constant 0 : index
    %c0_11 = arith.constant 0 : index
    %6 = vector.load %arg4[%c0_7, %c0_8, %c0_9, %c0_10, %c0_11] : memref<1x1x2x16x128xbf16, #tpu.memory_space<vmem>>, vector<1x1x1x16x128xbf16>
    %7 = vector.shape_cast %6 : vector<1x1x1x16x128xbf16> to vector<16x128xbf16>
    %cst_12 = arith.constant dense<0.000000e+00> : vector<128x128xf32>
    %8 = tpu.matmul %5, %7, %cst_12 {dimension_numbers = #tpu.dot_dimension_numbers<[1], [0], [0], [1], [0, 0, 1, 1], [], []>} : vector<128x16xbf16>, vector<16x128xbf16>, vector<128x128xf32> -> vector<128x128xf32>
    %c1_i32 = arith.constant 1 : i32
    %9 = vector.broadcast %c1_i32 : i32 to vector<128x128xi32>
    %10 = arith.cmpi eq, %2, %9 : vector<128x128xi32>
    %11 = arith.select %10, %8, %3 : vector<128x128xi1>, vector<128x128xf32>
    %c0_13 = arith.constant 0 : index
    %c0_14 = arith.constant 0 : index
    %c1 = arith.constant 1 : index
    %c0_15 = arith.constant 0 : index
    %c0_16 = arith.constant 0 : index
    %12 = vector.load %arg3[%c0_13, %c0_14, %c1, %c0_15, %c0_16] : memref<1x1x2x128x16xbf16, #tpu.memory_space<vmem>>, vector<1x1x1x128x16xbf16>
    %13 = vector.shape_cast %12 : vector<1x1x1x128x16xbf16> to vector<128x16xbf16>
    %c0_17 = arith.constant 0 : index
    %c0_18 = arith.constant 0 : index
    %c1_19 = arith.constant 1 : index
    %c0_20 = arith.constant 0 : index
    %c0_21 = arith.constant 0 : index
    %14 = vector.load %arg4[%c0_17, %c0_18, %c1_19, %c0_20, %c0_21] : memref<1x1x2x16x128xbf16, #tpu.memory_space<vmem>>, vector<1x1x1x16x128xbf16>
    %15 = vector.shape_cast %14 : vector<1x1x1x16x128xbf16> to vector<16x128xbf16>
    %cst_22 = arith.constant dense<0.000000e+00> : vector<128x128xf32>
    %16 = tpu.matmul %13, %15, %cst_22 {dimension_numbers = #tpu.dot_dimension_numbers<[1], [0], [0], [1], [0, 0, 1, 1], [], []>} : vector<128x16xbf16>, vector<16x128xbf16>, vector<128x128xf32> -> vector<128x128xf32>
    %c2_i32 = arith.constant 2 : i32
    %17 = vector.broadcast %c2_i32 : i32 to vector<128x128xi32>
    %18 = arith.cmpi eq, %2, %17 : vector<128x128xi32>
    %19 = arith.select %18, %16, %11 : vector<128x128xi1>, vector<128x128xf32>
    %cst_23 = arith.constant 0.000000e+00 : f32
    %20 = vector.broadcast %cst_23 : f32 to vector<128x128xf32>
    %21 = arith.cmpf oeq, %19, %20 : vector<128x128xf32>
    %cst_24 = arith.constant -1.000000e+09 : f32
    %22 = vector.broadcast %cst_24 : f32 to vector<128x128xf32>
    %23 = arith.select %21, %22, %19 : vector<128x128xi1>, vector<128x128xf32>
    %cst_25 = arith.constant dense<0xFF800000> : vector<128xf32>
    %24 = vector.multi_reduction <maximumf>, %23, %cst_25 [1] : vector<128x128xf32> to vector<128xf32>
    %25 = vector.shape_cast %24 : vector<128xf32> to vector<128x1xf32>
    %26 = vector.broadcast %25 : vector<128x1xf32> to vector<128x128xf32>
    %27 = arith.subf %23, %26 : vector<128x128xf32>
    %28 = math.exp %27 : vector<128x128xf32>
    %29 = tpu.iota {dimensions = array<i32: 1>} : vector<128x128xi32>
    %c16_i32 = arith.constant 16 : i32
    %30 = vector.broadcast %c16_i32 : i32 to vector<128x128xi32>
    %31 = arith.cmpi slt, %29, %30 : vector<128x128xi32>
    %cst_26 = arith.constant 0.000000e+00 : f32
    %32 = vector.broadcast %cst_26 : f32 to vector<128x128xf32>
    %33 = arith.select %31, %28, %32 : vector<128x128xi1>, vector<128x128xf32>
    %cst_27 = arith.constant dense<0.000000e+00> : vector<128xf32>
    %34 = vector.multi_reduction <add>, %33, %cst_27 [1] : vector<128x128xf32> to vector<128xf32>
    %35 = vector.shape_cast %34 : vector<128xf32> to vector<128x1xf32>
    %36 = tpu.reciprocal %35 {approx = true} : vector<128x1xf32> -> vector<128x1xf32>
    %37 = vector.broadcast %36 : vector<128x1xf32> to vector<128x128xf32>
    %38 = arith.mulf %33, %37 : vector<128x128xf32>
    %c0_28 = arith.constant 0 : index
    %c0_29 = arith.constant 0 : index
    %c0_30 = arith.constant 0 : index
    %c0_31 = arith.constant 0 : index
    %39 = vector.load %arg6[%c0_28, %c0_29, %c0_30, %c0_31] : memref<1x1x128x128xf32, #tpu.memory_space<vmem>>, vector<1x1x128x128xf32>
    %40 = vector.shape_cast %39 : vector<1x1x128x128xf32> to vector<128x128xf32>
    %41 = vector.shape_cast %38 : vector<128x128xf32> to vector<1x1x128x128xf32>
    tpu.vector_store %arg6[%c0_28, %c0_29, %c0_30, %c0_31], %41 {strides = array<i32>} : memref<1x1x128x128xf32, #tpu.memory_space<vmem>>, vector<1x1x128x128xf32>,
    return
  }
  func.func @transform_0(%arg0: i32, %arg1: i32, %arg2: i32) -> (i32, i32, i32, i32, i32) {
    %c0_i32 = arith.constant 0 : i32
    %c0_i32_0 = arith.constant 0 : i32
    %c0_i32_1 = arith.constant 0 : i32
    return %arg0, %arg2, %c0_i32, %arg1, %c0_i32_0 : i32, i32, i32, i32, i32
  }
  func.func @transform_1(%arg0: i32, %arg1: i32, %arg2: i32) -> (i32, i32, i32, i32, i32) {
    %c0_i32 = arith.constant 0 : i32
    %c0_i32_0 = arith.constant 0 : i32
    %c0_i32_1 = arith.constant 0 : i32
    %c0_i32_2 = arith.constant 0 : i32
    return %arg0, %arg2, %c0_i32, %c0_i32_0, %c0_i32_1 : i32, i32, i32, i32, i32
  }
  func.func @transform_2(%arg0: i32, %arg1: i32, %arg2: i32) -> (i32, i32, i32) {
    %c0_i32 = arith.constant 0 : i32
    %c0_i32_0 = arith.constant 0 : i32
    return %arg0, %arg1, %c0_i32 : i32, i32, i32
  }
  func.func @transform_3(%arg0: i32, %arg1: i32, %arg2: i32) -> (i32, i32, i32, i32) {
    %c0_i32 = arith.constant 0 : i32
    %c0_i32_0 = arith.constant 0 : i32
    return %arg2, %arg0, %arg1, %c0_i32 : i32, i32, i32, i32
  }
}

</mosaic_0001>

<llo_original>
// kernel: tpu_custom_call.1
$region0: #{tpu_custom_call.1}
  #allocation0 [shape = 'u32[]', space=smem, size = 0x4, offset = 0x4, fixed_abs, tag = 'smem constant byte address 0x4 - core index']
  #allocation1 [shape = 'u32[144,128]{1,0:T(1,128)}', space=vmem, size = 0x12000, scoped, tag = 'internal scratch']
  %s0 = inlined_call_operand.vmem [shape: bf16[2,4,2,128,16], index: 0, kind: input, shape index: {}]
  %s1 = inlined_call_operand.vmem [shape: bf16[2,4,2,16,128], index: 1, kind: input, shape index: {}]
  %s2 = inlined_call_operand.vmem [shape: s8[2,128,128], index: 2, kind: input, shape index: {}]
  %s3 = inlined_call_operand.hbm [shape: f32[4,2,128,128], index: 3, kind: output, shape index: {}]
  %s4 = sld [smem:[#allocation0]]
  $region45: #{tpu_custom_call.1} parent=0
    _
  %s6 = ssub.s32 1, %s4
  %s7 = scalar_select 0, %s6, %s4
  $region1: #{tpu_custom_call.1} parent=0
    #allocation2 [shape = 'u8[131072]{0}', space=vmem, size = 0x20000, scoped, tag = 'output window, operand 0']
    #allocation3 [shape = 's32[2]{0}', space=sflag, size = 0x8, scoped, tag = 'scoped memory for tpu_custom_call.1']
    %8 = vsyncpa [#allocation3], 0
    %s9 = scalar_lea.sflag [#allocation3], 1
    %10 = vsyncpa %s9, 0
    loop: start=0, step=1, limit=10
    $region2: #{tpu_custom_call.1} parent=1 // loop_pre_header
      _
    $region3: #{tpu_custom_call.1} parent=1 // loop_header
      %s12 = sphi 0, %s16
      %p13 = scmp.ge.s32.totalorder %s12, 10
      %s19 = sphi 0, %s38
      %s20 = sphi 0, %s34
      %s21 = sphi 0, %s30
      %s22 = sphi 0, %s19
      %s23 = sphi 0, %s20
      %s24 = sphi 0, %s21
      %s25 = sphi 0, %s22
      %s26 = sphi 0, %s23
      %s27 = sphi 0, %s24
      %s45 = sphi 0, %s47
      %s48 = sphi 0, %s45
      %s49 = sphi 0, %s48
      %s65 = sphi 0, %s49
      %s73 = sphi 0, %s75
      %s76 = sphi 0, %s73
      %s77 = sphi 0, %s76
      %s93 = sphi 0, %s77
      %s101 = sphi 0, %s103
      %s104 = sphi 0, %s101
      %s105 = sphi 0, %s104
      %s121 = sphi 0, %s105
      %s131 = sphi 0, %s133
      %s134 = sphi 0, %s131
      %s135 = sphi 0, %s134
      %s151 = sphi 0, %s135
    $region4: #{tpu_custom_call.1} parent=1 // loop_header_branch
      %15 = sbr.rel (%p13) target = $region8
    $region5: #{tpu_custom_call.1} parent=1 // loop_body
      %s17 = ssub.s32 %s12, 1
      %s18 = ssub.s32 %s12, 2
      %s28 = sadd.s32 1, %s21
      %p29 = scmp.ge.s32.totalorder %s28, 4
      %s30 = scalar_select %p29, 0, %s28
      %s31 = sadd.s32 1, %s20
      %s32 = scalar_select %p29, %s31, %s20
      %p33 = scmp.ge.s32.totalorder %s32, 1
      %s34 = scalar_select %p33, 0, %s32
      %s35 = sadd.s32 1, %s19
      %s36 = scalar_select %p33, %s35, %s19
      %p37 = scmp.ge.s32.totalorder %s36, 2
      %s38 = scalar_select %p37, 0, %s36
      %s39 = ssub.s32 %s19, %s38
      %s40 = ssub.s32 %s21, %s30
      %s41 = sor.u32 %s39, %s40
      %s42 = ssub.s32 %s20, %s34
      %s43 = sor.u32 %s41, %s42
      %p44 = scmp.eq.s32.totalorder %s43, 0
      %s46 = sadd.s32 %s45, 1
      %s47 = scalar_select %p44, %s45, %s46
      %p50 = pneg %p44
      %p51 = scmp.eq.s32.totalorder %s12, 7
      %p52 = por %p50, %p51
      %p53 = scmp.ne.s32.totalorder %s45, %s48
      %p54 = scmp.eq.s32.totalorder %s12, 0
      %p55 = por %p53, %p54
      %p56 = scmp.ne.s32.totalorder %s45, %s48
      %p57 = scmp.eq.s32.totalorder %s17, 7
      %p58 = por %p56, %p57
      %p59 = scmp.ne.s32.totalorder %s48, %s49
      %p60 = scmp.eq.s32.totalorder %s17, 0
      %p61 = por %p59, %p60
      %p62 = scmp.ne.s32.totalorder %s48, %s49
      %p63 = scmp.eq.s32.totalorder %s18, 7
      %p64 = por %p62, %p63
      %p66 = scmp.ne.s32.totalorder %s49, %s65
      %p67 = scmp.eq.s32.totalorder %s18, 0
      %p68 = por %p66, %p67
      %s69 = ssub.s32 %s19, %s38
      %s70 = ssub.s32 %s21, %s30
      %s71 = sor.u32 %s69, %s70
      %p72 = scmp.eq.s32.totalorder %s71, 0
      %s74 = sadd.s32 %s73, 1
      %s75 = scalar_select %p72, %s73, %s74
      %p78 = pneg %p72
      %p79 = scmp.eq.s32.totalorder %s12, 7
      %p80 = por %p78, %p79
      %p81 = scmp.ne.s32.totalorder %s73, %s76
      %p82 = scmp.eq.s32.totalorder %s12, 0
      %p83 = por %p81, %p82
      %p84 = scmp.ne.s32.totalorder %s73, %s76
      %p85 = scmp.eq.s32.totalorder %s17, 7
      %p86 = por %p84, %p85
      %p87 = scmp.ne.s32.totalorder %s76, %s77
      %p88 = scmp.eq.s32.totalorder %s17, 0
      %p89 = por %p87, %p88
      %p90 = scmp.ne.s32.totalorder %s76, %s77
      %p91 = scmp.eq.s32.totalorder %s18, 7
      %p92 = por %p90, %p91
      %p94 = scmp.ne.s32.totalorder %s77, %s93
      %p95 = scmp.eq.s32.totalorder %s18, 0
      %p96 = por %p94, %p95
      %s97 = ssub.s32 %s19, %s38
      %s98 = ssub.s32 %s20, %s34
      %s99 = sor.u32 %s97, %s98
      %p100 = scmp.eq.s32.totalorder %s99, 0
      %s102 = sadd.s32 %s101, 1
      %s103 = scalar_select %p100, %s101, %s102
      %p106 = pneg %p100
      %p107 = scmp.eq.s32.totalorder %s12, 7
      %p108 = por %p106, %p107
      %p109 = scmp.ne.s32.totalorder %s101, %s104
      %p110 = scmp.eq.s32.totalorder %s12, 0
      %p111 = por %p109, %p110
      %p112 = scmp.ne.s32.totalorder %s101, %s104
      %p113 = scmp.eq.s32.totalorder %s17, 7
      %p114 = por %p112, %p113
      %p115 = scmp.ne.s32.totalorder %s104, %s105
      %p116 = scmp.eq.s32.totalorder %s17, 0
      %p117 = por %p115, %p116
      %p118 = scmp.ne.s32.totalorder %s104, %s105
      %p119 = scmp.eq.s32.totalorder %s18, 7
      %p120 = por %p118, %p119
      %p122 = scmp.ne.s32.totalorder %s105, %s121
      %p123 = scmp.eq.s32.totalorder %s18, 0
      %p124 = por %p122, %p123
      %s125 = ssub.s32 %s21, %s30
      %s126 = ssub.s32 %s19, %s38
      %s127 = sor.u32 %s125, %s126
      %s128 = ssub.s32 %s20, %s34
      %s129 = sor.u32 %s127, %s128
      %p130 = scmp.eq.s32.totalorder %s129, 0
      %s132 = sadd.s32 %s131, 1
      %s133 = scalar_select %p130, %s131, %s132
      %p136 = pneg %p130
      %p137 = scmp.eq.s32.totalorder %s12, 7
      %p138 = por %p136, %p137
      %p139 = scmp.ne.s32.totalorder %s131, %s134
      %p140 = scmp.eq.s32.totalorder %s12, 0
      %p141 = por %p139, %p140
      %p142 = scmp.ne.s32.totalorder %s131, %s134
      %p143 = scmp.eq.s32.totalorder %s17, 7
      %p144 = por %p142, %p143
      %p145 = scmp.ne.s32.totalorder %s134, %s135
      %p146 = scmp.eq.s32.totalorder %s17, 0
      %p147 = por %p145, %p146
      %p148 = scmp.ne.s32.totalorder %s134, %s135
      %p149 = scmp.eq.s32.totalorder %s18, 7
      %p150 = por %p148, %p149
      %p152 = scmp.ne.s32.totalorder %s135, %s151
      %p153 = scmp.eq.s32.totalorder %s18, 0
      %p154 = por %p152, %p153
      %p155 = scmp.le.s32.totalorder 1, %s12
      %p156 = scmp.lt.s32.totalorder %s12, 9
      %p157 = pnand %p155, %p156
      %p158 = pneg %p157
      // Predicated region
      $region9: #{tpu_custom_call.1} parent=5 // pred_check
        _
      $region10: #{tpu_custom_call.1} parent=5 // pred_check_branch
        %160 = sbr.rel (%p157) target = $region12
      $region11: #{tpu_custom_call.1} parent=5 // pred_region
        %s161 = ssub.s32 %s12, 1
      $region12: #{tpu_custom_call.1} parent=5 // pred_fallthru
        _
      %p162 = scmp.lt.s32.totalorder %s12, 8
      // Predicated region
      $region13: #{tpu_custom_call.1} parent=5 // pred_check
        %p163 = pneg %p162
      $region14: #{tpu_custom_call.1} parent=5 // pred_check_branch
        %165 = sbr.rel (%p163) target = $region16
      $region15: #{tpu_custom_call.1} parent=5 // pred_region
        // Predicated region
        $region17: #{tpu_custom_call.1} parent=15 // pred_check
          %p166 = pneg %p55
        $region18: #{tpu_custom_call.1} parent=15 // pred_check_branch
          %168 = sbr.rel (%p166) target = $region20
        $region19: #{tpu_custom_call.1} parent=15 // pred_region
          %s169 = smul.u32 16, %s20
          %p170 = scmp.lt.s32.totalorder %s19, 1
          %s171 = scalar_select %p170, %s19, 1
          %p172 = scmp.lt.s32.totalorder %s21, 3
          %s173 = scalar_select %p172, %s21, 3
          %p174 = scmp.lt.s32.totalorder %s169, 15
          %s175 = scalar_select %p174, %s169, 15
          %s176 = smul.addr %s173, 32
          %s177 = sadd.s32 %s175, %s176
          %s178 = smul.addr %s171, 128
          %s179 = sadd.s32 %s177, %s178
          %s180 = smul.addr %s179, 4
          %s181 = scalar_lea.vmem %s0, %s180
          %s182 = smul.u32 16, %s20
        $region20: #{tpu_custom_call.1} parent=15 // pred_fallthru
          _
        // Predicated region
        $region21: #{tpu_custom_call.1} parent=15 // pred_check
          %p183 = pneg %p83
        $region22: #{tpu_custom_call.1} parent=15 // pred_check_branch
          %185 = sbr.rel (%p183) target = $region24
        $region23: #{tpu_custom_call.1} parent=15 // pred_region
          %p186 = scmp.lt.s32.totalorder %s19, 1
          %s187 = scalar_select %p186, %s19, 1
          %p188 = scmp.lt.s32.totalorder %s21, 3
          %s189 = scalar_select %p188, %s21, 3
          %s190 = smul.addr %s189, 4
          %s191 = smul.addr %s187, 16
          %s192 = sadd.s32 %s190, %s191
          %s193 = smul.addr %s192, 4
          %s194 = scalar_lea.vmem %s1, %s193
        $region24: #{tpu_custom_call.1} parent=15 // pred_fallthru
          _
        // Predicated region
        $region25: #{tpu_custom_call.1} parent=15 // pred_check
          %p195 = pneg %p111
        $region26: #{tpu_custom_call.1} parent=15 // pred_check_branch
          %197 = sbr.rel (%p195) target = $region28
        $region27: #{tpu_custom_call.1} parent=15 // pred_region
          %s198 = smul.u32 4, %s20
          %p199 = scmp.lt.s32.totalorder %s19, 1
          %s200 = scalar_select %p199, %s19, 1
          %p201 = scmp.lt.s32.totalorder %s198, 3
          %s202 = scalar_select %p201, %s198, 3
          %s203 = smul.addr %s200, 4
          %s204 = sadd.s32 %s202, %s203
          %s205 = smul.addr %s204, 8
          %s206 = scalar_lea.vmem %s2, %s205
          %s207 = smul.u32 4, %s20
        $region28: #{tpu_custom_call.1} parent=15 // pred_fallthru
          _
      $region16: #{tpu_custom_call.1} parent=5 // pred_fallthru
        _
      %p208 = scmp.le.s32.totalorder 1, %s12
      %p209 = scmp.lt.s32.totalorder %s12, 9
      %p210 = pnand %p208, %p209
      %p211 = pneg %p210
      // Predicated region
      $region29: #{tpu_custom_call.1} parent=5 // pred_check
        _
      $region30: #{tpu_custom_call.1} parent=5 // pred_check_branch
        %213 = sbr.rel (%p210) target = $region32
      $region31: #{tpu_custom_call.1} parent=5 // pred_region
        %s214 = ssub.s32 %s12, 1
        %s215 = smul.u32 16, %s23
        %p216 = scmp.lt.s32.totalorder %s22, 1
        %s217 = scalar_select %p216, %s22, 1
        %p218 = scmp.lt.s32.totalorder %s24, 3
        %s219 = scalar_select %p218, %s24, 3
        %p220 = scmp.lt.s32.totalorder %s215, 15
        %s221 = scalar_select %p220, %s215, 15
        %s222 = smul.addr %s219, 32
        %s223 = sadd.s32 %s221, %s222
        %s224 = smul.addr %s217, 128
        %s225 = sadd.s32 %s223, %s224
        %s226 = smul.addr %s225, 4
        %s227 = scalar_lea.vmem %s0, %s226
        %p228 = pneg %p61
        %p229 = pneg %p58
        %p230 = scmp.lt.s32.totalorder %s22, 1
        %s231 = scalar_select %p230, %s22, 1
        %p232 = scmp.lt.s32.totalorder %s24, 3
        %s233 = scalar_select %p232, %s24, 3
        %s234 = smul.addr %s233, 4
        %s235 = smul.addr %s231, 16
        %s236 = sadd.s32 %s234, %s235
        %s237 = smul.addr %s236, 4
        %s238 = scalar_lea.vmem %s1, %s237
        %p239 = pneg %p89
        %p240 = pneg %p86
        %s241 = smul.u32 4, %s23
        %p242 = scmp.lt.s32.totalorder %s22, 1
        %s243 = scalar_select %p242, %s22, 1
        %p244 = scmp.lt.s32.totalorder %s241, 3
        %s245 = scalar_select %p244, %s241, 3
        %s246 = smul.addr %s243, 4
        %s247 = sadd.s32 %s245, %s246
        %s248 = smul.addr %s247, 8
        %s249 = scalar_lea.vmem %s2, %s248
        %p250 = pneg %p117
        %p251 = pneg %p114
        %p252 = pneg %p147
        %p253 = pneg %p144
        %s254 = sand.u32 %s134, 1
        %s255 = scalar_lea.sflag [#allocation3], %s254
        %s256 = sand.u32 %s134, 1
        %s257 = smul.addr %s256, 128
        %s258 = scalar_lea.vmem [#allocation2], %s257
        %s259 = smul.u32 16, %s23
        %p260 = scmp.lt.s32.totalorder %s22, 1
        %s261 = scalar_select %p260, %s22, 1
        %p262 = scmp.lt.s32.totalorder %s24, 3
        %s263 = scalar_select %p262, %s24, 3
        %p264 = scmp.lt.s32.totalorder %s259, 15
        %s265 = scalar_select %p264, %s259, 15
        %s266 = smul.addr %s263, 32
        %s267 = sadd.s32 %s265, %s266
        %s268 = smul.addr %s261, 128
        %s269 = sadd.s32 %s267, %s268
        %s270 = smul.addr %s269, 4
        %s271 = scalar_lea.vmem %s0, %s270
        %s272 = smul.u32 16, %s23
        %p273 = scmp.lt.s32.totalorder %s22, 1
        %s274 = scalar_select %p273, %s22, 1
        %p275 = scmp.lt.s32.totalorder %s24, 3
        %s276 = scalar_select %p275, %s24, 3
        %s277 = smul.addr %s276, 4
        %s278 = smul.addr %s274, 16
        %s279 = sadd.s32 %s277, %s278
        %s280 = smul.addr %s279, 4
        %s281 = scalar_lea.vmem %s1, %s280
        %s282 = smul.u32 4, %s23
        %p283 = scmp.lt.s32.totalorder %s22, 1
        %s284 = scalar_select %p283, %s22, 1
        %p285 = scmp.lt.s32.totalorder %s282, 3
        %s286 = scalar_select %p285, %s282, 3
        %s287 = smul.addr %s284, 4
        %s288 = sadd.s32 %s286, %s287
        %s289 = smul.addr %s288, 8
        %s290 = scalar_lea.vmem %s2, %s289
        %s291 = smul.u32 4, %s23
        %s292 = smul.u32 16, %s23
        %v294 = vld [vmem:[%s290] sm:$0xff]
        %v295 = vld [vmem:[%s290 + $0x8] sm:$0xff]
        %v296 = vld [vmem:[%s290 + $0x10] sm:$0xff]
        %v297 = vld [vmem:[%s290 + $0x18] sm:$0xff]
        %v298 = vunpack.c.0.s8 %v294
        %v299 = vunpack.c.1.s8 %v294
        %v300 = vunpack.c.2.s8 %v294
        %v301 = vunpack.c.3.s8 %v294
        %v302 = vunpack.c.0.s8 %v295
        %v303 = vunpack.c.1.s8 %v295
        %v304 = vunpack.c.2.s8 %v295
        %v305 = vunpack.c.3.s8 %v295
        %v306 = vunpack.c.0.s8 %v296
        %v307 = vunpack.c.1.s8 %v296
        %v308 = vunpack.c.2.s8 %v296
        %v309 = vunpack.c.3.s8 %v296
        %v310 = vunpack.c.0.s8 %v297
        %v311 = vunpack.c.1.s8 %v297
        %v312 = vunpack.c.2.s8 %v297
        %v313 = vunpack.c.3.s8 %v297
        %v314 = vld [vmem:[%s271] sm:$0xf]
        %v315 = vld [vmem:[%s271 + $0x4] sm:$0xf]
        %v316 = vld [vmem:[%s271 + $0x8] sm:$0xf]
        %v317 = vld [vmem:[%s271 + $0xc] sm:$0xf]
        %v318 = vld [vmem:[%s271 + $0x10] sm:$0xf]
        %v319 = vld [vmem:[%s271 + $0x14] sm:$0xf]
        %v320 = vld [vmem:[%s271 + $0x18] sm:$0xf]
        %v321 = vld [vmem:[%s271 + $0x1c] sm:$0xf]
        %v322 = vld [vmem:[%s271 + $0x20] sm:$0xf]
        %v323 = vld [vmem:[%s271 + $0x24] sm:$0xf]
        %v324 = vld [vmem:[%s271 + $0x28] sm:$0xf]
        %v325 = vld [vmem:[%s271 + $0x2c] sm:$0xf]
        %v326 = vld [vmem:[%s271 + $0x30] sm:$0xf]
        %v327 = vld [vmem:[%s271 + $0x34] sm:$0xf]
        %v328 = vld [vmem:[%s271 + $0x38] sm:$0xf]
        %v329 = vld [vmem:[%s271 + $0x3c] sm:$0xf]
        %v330 = vld [vmem:[%s281] sm:$0xf]
        %v331 = vld [vmem:[%s281 + $0x4] sm:$0xf]
        %v348 = vunpack.c.l.b16 %v314
        %v349 = vunpack.c.l.b16 %v315
        %v350 = vunpack.c.l.b16 %v316
        %v351 = vunpack.c.l.b16 %v317
        %v352 = vunpack.c.l.b16 %v318
        %v353 = vunpack.c.l.b16 %v319
        %v354 = vunpack.c.l.b16 %v320
        %v355 = vunpack.c.l.b16 %v321
        %v356 = vunpack.c.l.b16 %v322
        %v357 = vunpack.c.l.b16 %v323
        %v358 = vunpack.c.l.b16 %v324
        %v359 = vunpack.c.l.b16 %v325
        %v360 = vunpack.c.l.b16 %v326
        %v361 = vunpack.c.l.b16 %v327
        %v362 = vunpack.c.l.b16 %v328
        %v363 = vunpack.c.l.b16 %v329
        %v364 = vpack.c.b16 %v349, %v348
        %v365 = vpack.c.b16 %v351, %v350
        %v366 = vpack.c.b16 %v353, %v352
        %v367 = vpack.c.b16 %v355, %v354
        %v368 = vpack.c.b16 %v357, %v356
        %v369 = vpack.c.b16 %v359, %v358
        %v370 = vpack.c.b16 %v361, %v360
        %v371 = vpack.c.b16 %v363, %v362
        %v374 = vunpack.c.l.b16 %v330
        %v375 = vunpack.c.l.b16 %v331
        %v376 = vpack.c.b16 %v375, %v374
        %vm378 = vcmask 130048
        %v380 = vsel %vm378, %v364, 0
        %v383 = vsel %vm378, %v365, 0
        %v386 = vsel %vm378, %v366, 0
        %v389 = vsel %vm378, %v367, 0
        %v392 = vsel %vm378, %v368, 0
        %v395 = vsel %vm378, %v369, 0
        %v398 = vsel %vm378, %v370, 0
        %v401 = vsel %vm378, %v371, 0
        %403 = vmatprep.subr.bf16.mxu0 0
        %404 = vmatpush1.bf16.msra.mxu0 0
        %405 = vmatprep.subr.bf16.mxu0 0
        %406 = vmatpush1.bf16.msra.mxu0 0
        %407 = vmatprep.subr.bf16.mxu0 0
        %408 = vmatpush1.bf16.msra.mxu0 0
        %409 = vmatprep.subr.bf16.mxu0 0
        %410 = vmatpush1.bf16.msra.mxu0 0
        %411 = vmatprep.subr.bf16.mxu0 0
        %412 = vmatpush1.bf16.msra.mxu0 0
        %413 = vmatprep.subr.bf16.mxu0 0
        %414 = vmatpush1.bf16.msra.mxu0 0
        %415 = vmatprep.subr.bf16.mxu0 0
        %416 = vmatpush1.bf16.msra.mxu0 0
        %417 = vmatprep.subr.bf16.mxu0 0
        %418 = vmatpush1.bf16.msra.mxu0 %v376
        %419 = vmatprep.subr.bf16.mxu0 0
        %420 = vmatpush2.bf16.msra.mxu0 0
        %421 = vmatprep.subr.bf16.mxu0 0
        %422 = vmatpush2.bf16.msra.mxu0 0
        %423 = vmatprep.subr.bf16.mxu0 0
        %424 = vmatpush2.bf16.msra.mxu0 0
        %425 = vmatprep.subr.bf16.mxu0 0
        %426 = vmatpush2.bf16.msra.mxu0 0
        %427 = vmatprep.subr.bf16.mxu0 0
        %428 = vmatpush2.bf16.msra.mxu0 0
        %429 = vmatprep.subr.bf16.mxu0 0
        %430 = vmatpush2.bf16.msra.mxu0 0
        %431 = vmatprep.subr.bf16.mxu0 0
        %432 = vmatpush2.bf16.msra.mxu0 0
        %433 = vmatprep.subr.bf16.mxu0 0
        %434 = vmatpush2.bf16.msra.mxu0 0
        %435 = vmatprep.mubr.bf16.mxu0 0
        %436 = vmatmul.mubr.bf16.gmra.mxu0 %v380
        %v437 = vpop.f32.mrf.mxu0
        %v438 = vadd.f32 0.0, %v437
        %v439 = vpop.f32.mrf.mxu0
        %v440 = vpop.f32.mrf.mxu0
        %v441 = vadd.f32 0.0, %v440
        %v442 = vpop.f32.mrf.mxu0
        %443 = vmatprep.mubr.bf16.mxu0 0
        %444 = vmatmul.mubr.bf16.gmra.mxu0 %v383
        %v445 = vpop.f32.mrf.mxu0
        %v446 = vadd.f32 0.0, %v445
        %v447 = vpop.f32.mrf.mxu0
        %v448 = vpop.f32.mrf.mxu0
        %v449 = vadd.f32 0.0, %v448
        %v450 = vpop.f32.mrf.mxu0
        %451 = vmatprep.mubr.bf16.mxu0 0
        %452 = vmatmul.mubr.bf16.gmra.mxu0 %v386
        %v453 = vpop.f32.mrf.mxu0
        %v454 = vadd.f32 0.0, %v453
        %v455 = vpop.f32.mrf.mxu0
        %v456 = vpop.f32.mrf.mxu0
        %v457 = vadd.f32 0.0, %v456
        %v458 = vpop.f32.mrf.mxu0
        %459 = vmatprep.mubr.bf16.mxu0 0
        %460 = vmatmul.mubr.bf16.gmra.mxu0 %v389
        %v461 = vpop.f32.mrf.mxu0
        %v462 = vadd.f32 0.0, %v461
        %v463 = vpop.f32.mrf.mxu0
        %v464 = vpop.f32.mrf.mxu0
        %v465 = vadd.f32 0.0, %v464
        %v466 = vpop.f32.mrf.mxu0
        %467 = vmatprep.mubr.bf16.mxu0 0
        %468 = vmatmul.mubr.bf16.gmra.mxu0 %v392
        %v469 = vpop.f32.mrf.mxu0
        %v470 = vadd.f32 0.0, %v469
        %v471 = vpop.f32.mrf.mxu0
        %v472 = vpop.f32.mrf.mxu0
        %v473 = vadd.f32 0.0, %v472
        %v474 = vpop.f32.mrf.mxu0
        %475 = vmatprep.mubr.bf16.mxu0 0
        %476 = vmatmul.mubr.bf16.gmra.mxu0 %v395
        %v477 = vpop.f32.mrf.mxu0
        %v478 = vadd.f32 0.0, %v477
        %v479 = vpop.f32.mrf.mxu0
        %v480 = vpop.f32.mrf.mxu0
        %v481 = vadd.f32 0.0, %v480
        %v482 = vpop.f32.mrf.mxu0
        %483 = vmatprep.mubr.bf16.mxu0 0
        %484 = vmatmul.mubr.bf16.gmra.mxu0 %v398
        %v485 = vpop.f32.mrf.mxu0
        %v486 = vadd.f32 0.0, %v485
        %v487 = vpop.f32.mrf.mxu0
        %v488 = vpop.f32.mrf.mxu0
        %v489 = vadd.f32 0.0, %v488
        %v490 = vpop.f32.mrf.mxu0
        %491 = vmatprep.mubr.bf16.mxu0 0
        %492 = vmatmul.mubr.bf16.gmra.mxu0 %v401
        %v493 = vpop.f32.mrf.mxu0
        %v494 = vadd.f32 0.0, %v493
        %v495 = vpop.f32.mrf.mxu0
        %v496 = vpop.f32.mrf.mxu0
        %v497 = vadd.f32 0.0, %v496
        %v498 = vpop.f32.mrf.mxu0
        %499 = vdwg.mxu0
        %vm500 = vcmp.eq.s32.totalorder %v298, 1
        %vm501 = vcmp.eq.s32.totalorder %v299, 1
        %vm502 = vcmp.eq.s32.totalorder %v300, 1
        %vm503 = vcmp.eq.s32.totalorder %v301, 1
        %vm504 = vcmp.eq.s32.totalorder %v302, 1
        %vm505 = vcmp.eq.s32.totalorder %v303, 1
        %vm506 = vcmp.eq.s32.totalorder %v304, 1
        %vm507 = vcmp.eq.s32.totalorder %v305, 1
        %vm508 = vcmp.eq.s32.totalorder %v306, 1
        %vm509 = vcmp.eq.s32.totalorder %v307, 1
        %vm510 = vcmp.eq.s32.totalorder %v308, 1
        %vm511 = vcmp.eq.s32.totalorder %v309, 1
        %vm512 = vcmp.eq.s32.totalorder %v310, 1
        %vm513 = vcmp.eq.s32.totalorder %v311, 1
        %vm514 = vcmp.eq.s32.totalorder %v312, 1
        %vm515 = vcmp.eq.s32.totalorder %v313, 1
        %v516 = vsel %vm500, %v438, 0.0
        %v517 = vsel %vm501, %v441, 0.0
        %v518 = vsel %vm502, %v446, 0.0
        %v519 = vsel %vm503, %v449, 0.0
        %v520 = vsel %vm504, %v454, 0.0
        %v521 = vsel %vm505, %v457, 0.0
        %v522 = vsel %vm506, %v462, 0.0
        %v523 = vsel %vm507, %v465, 0.0
        %v524 = vsel %vm508, %v470, 0.0
        %v525 = vsel %vm509, %v473, 0.0
        %v526 = vsel %vm510, %v478, 0.0
        %v527 = vsel %vm511, %v481, 0.0
        %v528 = vsel %vm512, %v486, 0.0
        %v529 = vsel %vm513, %v489, 0.0
        %v530 = vsel %vm514, %v494, 0.0
        %v531 = vsel %vm515, %v497, 0.0
        %s532 = scalar_lea.vmem %s271, 64
        %v533 = vld [vmem:[%s532] sm:$0xf]
        %v534 = vld [vmem:[%s532 + $0x4] sm:$0xf]
        %v535 = vld [vmem:[%s532 + $0x8] sm:$0xf]
        %v536 = vld [vmem:[%s532 + $0xc] sm:$0xf]
        %v537 = vld [vmem:[%s532 + $0x10] sm:$0xf]
        %v538 = vld [vmem:[%s532 + $0x14] sm:$0xf]
        %v539 = vld [vmem:[%s532 + $0x18] sm:$0xf]
        %v540 = vld [vmem:[%s532 + $0x1c] sm:$0xf]
        %v541 = vld [vmem:[%s532 + $0x20] sm:$0xf]
        %v542 = vld [vmem:[%s532 + $0x24] sm:$0xf]
        %v543 = vld [vmem:[%s532 + $0x28] sm:$0xf]
        %v544 = vld [vmem:[%s532 + $0x2c] sm:$0xf]
        %v545 = vld [vmem:[%s532 + $0x30] sm:$0xf]
        %v546 = vld [vmem:[%s532 + $0x34] sm:$0xf]
        %v547 = vld [vmem:[%s532 + $0x38] sm:$0xf]
        %v548 = vld [vmem:[%s532 + $0x3c] sm:$0xf]
        %s549 = scalar_lea.vmem %s281, 8
        %v550 = vld [vmem:[%s549] sm:$0xf]
        %v551 = vld [vmem:[%s549 + $0x4] sm:$0xf]
        %v568 = vunpack.c.l.b16 %v533
        %v569 = vunpack.c.l.b16 %v534
        %v570 = vunpack.c.l.b16 %v535
        %v571 = vunpack.c.l.b16 %v536
        %v572 = vunpack.c.l.b16 %v537
        %v573 = vunpack.c.l.b16 %v538
        %v574 = vunpack.c.l.b16 %v539
        %v575 = vunpack.c.l.b16 %v540
        %v576 = vunpack.c.l.b16 %v541
        %v577 = vunpack.c.l.b16 %v542
        %v578 = vunpack.c.l.b16 %v543
        %v579 = vunpack.c.l.b16 %v544
        %v580 = vunpack.c.l.b16 %v545
        %v581 = vunpack.c.l.b16 %v546
        %v582 = vunpack.c.l.b16 %v547
        %v583 = vunpack.c.l.b16 %v548
        %v584 = vpack.c.b16 %v569, %v568
        %v585 = vpack.c.b16 %v571, %v570
        %v586 = vpack.c.b16 %v573, %v572
        %v587 = vpack.c.b16 %v575, %v574
        %v588 = vpack.c.b16 %v577, %v576
        %v589 = vpack.c.b16 %v579, %v578
        %v590 = vpack.c.b16 %v581, %v580
        %v591 = vpack.c.b16 %v583, %v582
        %v594 = vunpack.c.l.b16 %v550
        %v595 = vunpack.c.l.b16 %v551
        %v596 = vpack.c.b16 %v595, %v594
        %v599 = vsel %vm378, %v584, 0
        %v602 = vsel %vm378, %v585, 0
        %v605 = vsel %vm378, %v586, 0
        %v608 = vsel %vm378, %v587, 0
        %v611 = vsel %vm378, %v588, 0
        %v614 = vsel %vm378, %v589, 0
        %v617 = vsel %vm378, %v590, 0
        %v620 = vsel %vm378, %v591, 0
        %622 = vmatprep.subr.bf16.mxu0 0
        %623 = vmatpush1.bf16.msra.mxu0 0
        %624 = vmatprep.subr.bf16.mxu0 0
        %625 = vmatpush1.bf16.msra.mxu0 0
        %626 = vmatprep.subr.bf16.mxu0 0
        %627 = vmatpush1.bf16.msra.mxu0 0
        %628 = vmatprep.subr.bf16.mxu0 0
        %629 = vmatpush1.bf16.msra.mxu0 0
        %630 = vmatprep.subr.bf16.mxu0 0
        %631 = vmatpush1.bf16.msra.mxu0 0
        %632 = vmatprep.subr.bf16.mxu0 0
        %633 = vmatpush1.bf16.msra.mxu0 0
        %634 = vmatprep.subr.bf16.mxu0 0
        %635 = vmatpush1.bf16.msra.mxu0 0
        %636 = vmatprep.subr.bf16.mxu0 0
        %637 = vmatpush1.bf16.msra.mxu0 %v596
        %638 = vmatprep.subr.bf16.mxu0 0
        %639 = vmatpush2.bf16.msra.mxu0 0
        %640 = vmatprep.subr.bf16.mxu0 0
        %641 = vmatpush2.bf16.msra.mxu0 0
        %642 = vmatprep.subr.bf16.mxu0 0
        %643 = vmatpush2.bf16.msra.mxu0 0
        %644 = vmatprep.subr.bf16.mxu0 0
        %645 = vmatpush2.bf16.msra.mxu0 0
        %646 = vmatprep.subr.bf16.mxu0 0
        %647 = vmatpush2.bf16.msra.mxu0 0
        %648 = vmatprep.subr.bf16.mxu0 0
        %649 = vmatpush2.bf16.msra.mxu0 0
        %650 = vmatprep.subr.bf16.mxu0 0
        %651 = vmatpush2.bf16.msra.mxu0 0
        %652 = vmatprep.subr.bf16.mxu0 0
        %653 = vmatpush2.bf16.msra.mxu0 0
        %654 = vmatprep.mubr.bf16.mxu0 0
        %655 = vmatmul.mubr.bf16.gmra.mxu0 %v599
        %v656 = vpop.f32.mrf.mxu0
        %v657 = vadd.f32 0.0, %v656
        %v658 = vpop.f32.mrf.mxu0
        %v659 = vpop.f32.mrf.mxu0
        %v660 = vadd.f32 0.0, %v659
        %v661 = vpop.f32.mrf.mxu0
        %662 = vmatprep.mubr.bf16.mxu0 0
        %663 = vmatmul.mubr.bf16.gmra.mxu0 %v602
        %v664 = vpop.f32.mrf.mxu0
        %v665 = vadd.f32 0.0, %v664
        %v666 = vpop.f32.mrf.mxu0
        %v667 = vpop.f32.mrf.mxu0
        %v668 = vadd.f32 0.0, %v667
        %v669 = vpop.f32.mrf.mxu0
        %670 = vmatprep.mubr.bf16.mxu0 0
        %671 = vmatmul.mubr.bf16.gmra.mxu0 %v605
        %v672 = vpop.f32.mrf.mxu0
        %v673 = vadd.f32 0.0, %v672
        %v674 = vpop.f32.mrf.mxu0
        %v675 = vpop.f32.mrf.mxu0
        %v676 = vadd.f32 0.0, %v675
        %v677 = vpop.f32.mrf.mxu0
        %678 = vmatprep.mubr.bf16.mxu0 0
        %679 = vmatmul.mubr.bf16.gmra.mxu0 %v608
        %v680 = vpop.f32.mrf.mxu0
        %v681 = vadd.f32 0.0, %v680
        %v682 = vpop.f32.mrf.mxu0
        %v683 = vpop.f32.mrf.mxu0
        %v684 = vadd.f32 0.0, %v683
        %v685 = vpop.f32.mrf.mxu0
        %686 = vmatprep.mubr.bf16.mxu0 0
        %687 = vmatmul.mubr.bf16.gmra.mxu0 %v611
        %v688 = vpop.f32.mrf.mxu0
        %v689 = vadd.f32 0.0, %v688
        %v690 = vpop.f32.mrf.mxu0
        %v691 = vpop.f32.mrf.mxu0
        %v692 = vadd.f32 0.0, %v691
        %v693 = vpop.f32.mrf.mxu0
        %694 = vmatprep.mubr.bf16.mxu0 0
        %695 = vmatmul.mubr.bf16.gmra.mxu0 %v614
        %v696 = vpop.f32.mrf.mxu0
        %v697 = vadd.f32 0.0, %v696
        %v698 = vpop.f32.mrf.mxu0
        %v699 = vpop.f32.mrf.mxu0
        %v700 = vadd.f32 0.0, %v699
        %v701 = vpop.f32.mrf.mxu0
        %702 = vmatprep.mubr.bf16.mxu0 0
        %703 = vmatmul.mubr.bf16.gmra.mxu0 %v617
        %v704 = vpop.f32.mrf.mxu0
        %v705 = vadd.f32 0.0, %v704
        %v706 = vpop.f32.mrf.mxu0
        %v707 = vpop.f32.mrf.mxu0
        %v708 = vadd.f32 0.0, %v707
        %v709 = vpop.f32.mrf.mxu0
        %710 = vmatprep.mubr.bf16.mxu0 0
        %711 = vmatmul.mubr.bf16.gmra.mxu0 %v620
        %v712 = vpop.f32.mrf.mxu0
        %v713 = vadd.f32 0.0, %v712
        %v714 = vpop.f32.mrf.mxu0
        %v715 = vpop.f32.mrf.mxu0
        %v716 = vadd.f32 0.0, %v715
        %v717 = vpop.f32.mrf.mxu0
        %718 = vdwg.mxu0
        %vm719 = vcmp.eq.s32.totalorder %v298, 2
        %vm720 = vcmp.eq.s32.totalorder %v299, 2
        %vm721 = vcmp.eq.s32.totalorder %v300, 2
        %vm722 = vcmp.eq.s32.totalorder %v301, 2
        %vm723 = vcmp.eq.s32.totalorder %v302, 2
        %vm724 = vcmp.eq.s32.totalorder %v303, 2
        %vm725 = vcmp.eq.s32.totalorder %v304, 2
        %vm726 = vcmp.eq.s32.totalorder %v305, 2
        %vm727 = vcmp.eq.s32.totalorder %v306, 2
        %vm728 = vcmp.eq.s32.totalorder %v307, 2
        %vm729 = vcmp.eq.s32.totalorder %v308, 2
        %vm730 = vcmp.eq.s32.totalorder %v309, 2
        %vm731 = vcmp.eq.s32.totalorder %v310, 2
        %vm732 = vcmp.eq.s32.totalorder %v311, 2
        %vm733 = vcmp.eq.s32.totalorder %v312, 2
        %vm734 = vcmp.eq.s32.totalorder %v313, 2
        %v735 = vsel %vm719, %v657, %v516
        %v736 = vsel %vm720, %v660, %v517
        %v737 = vsel %vm721, %v665, %v518
        %v738 = vsel %vm722, %v668, %v519
        %v739 = vsel %vm723, %v673, %v520
        %v740 = vsel %vm724, %v676, %v521
        %v741 = vsel %vm725, %v681, %v522
        %v742 = vsel %vm726, %v684, %v523
        %v743 = vsel %vm727, %v689, %v524
        %v744 = vsel %vm728, %v692, %v525
        %v745 = vsel %vm729, %v697, %v526
        %v746 = vsel %vm730, %v700, %v527
        %v747 = vsel %vm731, %v705, %v528
        %v748 = vsel %vm732, %v708, %v529
        %v749 = vsel %vm733, %v713, %v530
        %v750 = vsel %vm734, %v716, %v531
        %vm751 = vcmp.eq.f32.partialorder %v735, 0.0
        %vm752 = vcmp.eq.f32.partialorder %v736, 0.0
        %vm753 = vcmp.eq.f32.partialorder %v737, 0.0
        %vm754 = vcmp.eq.f32.partialorder %v738, 0.0
        %vm755 = vcmp.eq.f32.partialorder %v739, 0.0
        %vm756 = vcmp.eq.f32.partialorder %v740, 0.0
        %vm757 = vcmp.eq.f32.partialorder %v741, 0.0
        %vm758 = vcmp.eq.f32.partialorder %v742, 0.0
        %vm759 = vcmp.eq.f32.partialorder %v743, 0.0
        %vm760 = vcmp.eq.f32.partialorder %v744, 0.0
        %vm761 = vcmp.eq.f32.partialorder %v745, 0.0
        %vm762 = vcmp.eq.f32.partialorder %v746, 0.0
        %vm763 = vcmp.eq.f32.partialorder %v747, 0.0
        %vm764 = vcmp.eq.f32.partialorder %v748, 0.0
        %vm765 = vcmp.eq.f32.partialorder %v749, 0.0
        %vm766 = vcmp.eq.f32.partialorder %v750, 0.0
        %v767 = vsel %vm751, -1e+09, %v735
        %v768 = vsel %vm752, -1e+09, %v736
        %v769 = vsel %vm753, -1e+09, %v737
        %v770 = vsel %vm754, -1e+09, %v738
        %v771 = vsel %vm755, -1e+09, %v739
        %v772 = vsel %vm756, -1e+09, %v740
        %v773 = vsel %vm757, -1e+09, %v741
        %v774 = vsel %vm758, -1e+09, %v742
        %v775 = vsel %vm759, -1e+09, %v743
        %v776 = vsel %vm760, -1e+09, %v744
        %v777 = vsel %vm761, -1e+09, %v745
        %v778 = vsel %vm762, -1e+09, %v746
        %v779 = vsel %vm763, -1e+09, %v747
        %v780 = vsel %vm764, -1e+09, %v748
        %v781 = vsel %vm765, -1e+09, %v749
        %v782 = vsel %vm766, -1e+09, %v750
        %783 = vmax.xlane.f32.xlu0 %v767
        %v784 = vpop.xlane.xlu0 %783
        %785 = vmax.xlane.f32.xlu0 %v768
        %v786 = vpop.xlane.xlu0 %785
        %787 = vmax.xlane.f32.xlu0 %v769
        %v788 = vpop.xlane.xlu0 %787
        %789 = vmax.xlane.f32.xlu0 %v770
        %v790 = vpop.xlane.xlu0 %789
        %791 = vmax.xlane.f32.xlu0 %v771
        %v792 = vpop.xlane.xlu0 %791
        %793 = vmax.xlane.f32.xlu0 %v772
        %v794 = vpop.xlane.xlu0 %793
        %795 = vmax.xlane.f32.xlu0 %v773
        %v796 = vpop.xlane.xlu0 %795
        %797 = vmax.xlane.f32.xlu0 %v774
        %v798 = vpop.xlane.xlu0 %797
        %799 = vmax.xlane.f32.xlu0 %v775
        %v800 = vpop.xlane.xlu0 %799
        %801 = vmax.xlane.f32.xlu0 %v776
        %v802 = vpop.xlane.xlu0 %801
        %803 = vmax.xlane.f32.xlu0 %v777
        %v804 = vpop.xlane.xlu0 %803
        %805 = vmax.xlane.f32.xlu0 %v778
        %v806 = vpop.xlane.xlu0 %805
        %807 = vmax.xlane.f32.xlu0 %v779
        %v808 = vpop.xlane.xlu0 %807
        %809 = vmax.xlane.f32.xlu0 %v780
        %v810 = vpop.xlane.xlu0 %809
        %811 = vmax.xlane.f32.xlu0 %v781
        %v812 = vpop.xlane.xlu0 %811
        %813 = vmax.xlane.f32.xlu0 %v782
        %v814 = vpop.xlane.xlu0 %813
        %v815 = vsub.f32 %v767, %v784
        %v816 = vsub.f32 %v768, %v786
        %v817 = vsub.f32 %v769, %v788
        %v818 = vsub.f32 %v770, %v790
        %v819 = vsub.f32 %v771, %v792
        %v820 = vsub.f32 %v772, %v794
        %v821 = vsub.f32 %v773, %v796
        %v822 = vsub.f32 %v774, %v798
        %v823 = vsub.f32 %v775, %v800
        %v824 = vsub.f32 %v776, %v802
        %v825 = vsub.f32 %v777, %v804
        %v826 = vsub.f32 %v778, %v806
        %v827 = vsub.f32 %v779, %v808
        %v828 = vsub.f32 %v780, %v810
        %v829 = vsub.f32 %v781, %v812
        %v830 = vsub.f32 %v782, %v814
        %v831 = vmul.f32 %v815, 1.442695
        %v832 = vpow.pop %v831
        %v833 = vmul.f32 %v816, 1.442695
        %v834 = vpow.pop %v833
        %v835 = vmul.f32 %v817, 1.442695
        %v836 = vpow.pop %v835
        %v837 = vmul.f32 %v818, 1.442695
        %v838 = vpow.pop %v837
        %v839 = vmul.f32 %v819, 1.442695
        %v840 = vpow.pop %v839
        %v841 = vmul.f32 %v820, 1.442695
        %v842 = vpow.pop %v841
        %v843 = vmul.f32 %v821, 1.442695
        %v844 = vpow.pop %v843
        %v845 = vmul.f32 %v822, 1.442695
        %v846 = vpow.pop %v845
        %v847 = vmul.f32 %v823, 1.442695
        %v848 = vpow.pop %v847
        %v849 = vmul.f32 %v824, 1.442695
        %v850 = vpow.pop %v849
        %v851 = vmul.f32 %v825, 1.442695
        %v852 = vpow.pop %v851
        %v853 = vmul.f32 %v826, 1.442695
        %v854 = vpow.pop %v853
        %v855 = vmul.f32 %v827, 1.442695
        %v856 = vpow.pop %v855
        %v857 = vmul.f32 %v828, 1.442695
        %v858 = vpow.pop %v857
        %v859 = vmul.f32 %v829, 1.442695
        %v860 = vpow.pop %v859
        %v861 = vmul.f32 %v830, 1.442695
        %v862 = vpow.pop %v861
        %v863 = vlaneseq
        %v864 = vand.u32 %v863, 127
        %vm865 = vcmp.lt.s32.totalorder %v864, 16
        %v866 = vsel %vm865, %v832, 0.0
        %v867 = vsel %vm865, %v834, 0.0
        %v868 = vsel %vm865, %v836, 0.0
        %v869 = vsel %vm865, %v838, 0.0
        %v870 = vsel %vm865, %v840, 0.0
        %v871 = vsel %vm865, %v842, 0.0
        %v872 = vsel %vm865, %v844, 0.0
        %v873 = vsel %vm865, %v846, 0.0
        %v874 = vsel %vm865, %v848, 0.0
        %v875 = vsel %vm865, %v850, 0.0
        %v876 = vsel %vm865, %v852, 0.0
        %v877 = vsel %vm865, %v854, 0.0
        %v878 = vsel %vm865, %v856, 0.0
        %v879 = vsel %vm865, %v858, 0.0
        %v880 = vsel %vm865, %v860, 0.0
        %v881 = vsel %vm865, %v862, 0.0
        %882 = vadd.xlane.f32.xlu0 %v866
        %v883 = vpop.xlane.xlu0 %882
        %884 = vadd.xlane.f32.xlu0 %v867
        %v885 = vpop.xlane.xlu0 %884
        %886 = vadd.xlane.f32.xlu0 %v868
        %v887 = vpop.xlane.xlu0 %886
        %888 = vadd.xlane.f32.xlu0 %v869
        %v889 = vpop.xlane.xlu0 %888
        %890 = vadd.xlane.f32.xlu0 %v870
        %v891 = vpop.xlane.xlu0 %890
        %892 = vadd.xlane.f32.xlu0 %v871
        %v893 = vpop.xlane.xlu0 %892
        %894 = vadd.xlane.f32.xlu0 %v872
        %v895 = vpop.xlane.xlu0 %894
        %896 = vadd.xlane.f32.xlu0 %v873
        %v897 = vpop.xlane.xlu0 %896
        %898 = vadd.xlane.f32.xlu0 %v874
        %v899 = vpop.xlane.xlu0 %898
        %900 = vadd.xlane.f32.xlu0 %v875
        %v901 = vpop.xlane.xlu0 %900
        %902 = vadd.xlane.f32.xlu0 %v876
        %v903 = vpop.xlane.xlu0 %902
        %904 = vadd.xlane.f32.xlu0 %v877
        %v905 = vpop.xlane.xlu0 %904
        %906 = vadd.xlane.f32.xlu0 %v878
        %v907 = vpop.xlane.xlu0 %906
        %908 = vadd.xlane.f32.xlu0 %v879
        %v909 = vpop.xlane.xlu0 %908
        %910 = vadd.xlane.f32.xlu0 %v880
        %v911 = vpop.xlane.xlu0 %910
        %912 = vadd.xlane.f32.xlu0 %v881
        %v913 = vpop.xlane.xlu0 %912
        %v914 = vrcp.pop %v883
        %v915 = vrcp.pop %v885
        %v916 = vrcp.pop %v887
        %v917 = vrcp.pop %v889
        %v918 = vrcp.pop %v891
        %v919 = vrcp.pop %v893
        %v920 = vrcp.pop %v895
        %v921 = vrcp.pop %v897
        %v922 = vrcp.pop %v899
        %v923 = vrcp.pop %v901
        %v924 = vrcp.pop %v903
        %v925 = vrcp.pop %v905
        %v926 = vrcp.pop %v907
        %v927 = vrcp.pop %v909
        %v928 = vrcp.pop %v911
        %v929 = vrcp.pop %v913
        %v930 = vmul.f32 %v866, %v914
        %v931 = vmul.f32 %v867, %v915
        %v932 = vmul.f32 %v868, %v916
        %v933 = vmul.f32 %v869, %v917
        %v934 = vmul.f32 %v870, %v918
        %v935 = vmul.f32 %v871, %v919
        %v936 = vmul.f32 %v872, %v920
        %v937 = vmul.f32 %v873, %v921
        %v938 = vmul.f32 %v874, %v922
        %v939 = vmul.f32 %v875, %v923
        %v940 = vmul.f32 %v876, %v924
        %v941 = vmul.f32 %v877, %v925
        %v942 = vmul.f32 %v878, %v926
        %v943 = vmul.f32 %v879, %v927
        %v944 = vmul.f32 %v880, %v928
        %v945 = vmul.f32 %v881, %v929
        %946 = vst [vmem:[%s258] sm:$0xff] %v930
        %947 = vst [vmem:[%s258 + $0x8] sm:$0xff] %v931
        %948 = vst [vmem:[%s258 + $0x10] sm:$0xff] %v932
        %949 = vst [vmem:[%s258 + $0x18] sm:$0xff] %v933
        %950 = vst [vmem:[%s258 + $0x20] sm:$0xff] %v934
        %951 = vst [vmem:[%s258 + $0x28] sm:$0xff] %v935
        %952 = vst [vmem:[%s258 + $0x30] sm:$0xff] %v936
        %953 = vst [vmem:[%s258 + $0x38] sm:$0xff] %v937
        %954 = vst [vmem:[%s258 + $0x40] sm:$0xff] %v938
        %955 = vst [vmem:[%s258 + $0x48] sm:$0xff] %v939
        %956 = vst [vmem:[%s258 + $0x50] sm:$0xff] %v940
        %957 = vst [vmem:[%s258 + $0x58] sm:$0xff] %v941
        %958 = vst [vmem:[%s258 + $0x60] sm:$0xff] %v942
        %959 = vst [vmem:[%s258 + $0x68] sm:$0xff] %v943
        %960 = vst [vmem:[%s258 + $0x70] sm:$0xff] %v944
        %961 = vst [vmem:[%s258 + $0x78] sm:$0xff] %v945
        %s962 = sand.u32 %s134, 1
        %s963 = scalar_lea.sflag [#allocation3], %s962
        %s964 = sand.u32 %s134, 1
        %s965 = smul.addr %s964, 128
        %s966 = scalar_lea.vmem [#allocation2], %s965
        // Predicated region
        $region33: #{tpu_custom_call.1} parent=31 // pred_check
          %p967 = pneg %p144
        $region34: #{tpu_custom_call.1} parent=31 // pred_check_branch
          %969 = sbr.rel (%p967) target = $region36
        $region35: #{tpu_custom_call.1} parent=31 // pred_region
          %s970 = smul.u32 16, %s23
          %s972 = ssub.s32 2048, 2048
          %973 = vsyncadd %s963, %s972
          %s974 = smul.addr %s22, 16
          %s975 = sadd.s32 %s970, %s974
          %s976 = smul.addr %s24, 32
          %s977 = sadd.s32 %s975, %s976
          %s978 = smul.addr %s977, 128
          %s979 = scalar_lea.hbm %s3, %s978
          %s980 = sshll.u32 %s966, 4
          %s981 = int_to_ptr.vmem [resolvable:$true] %s980
          %986 = dma.vmem_to_hbm [thread:$0]  %s981, 2048, %s979, %s963, 128, 128, 8
        $region36: #{tpu_custom_call.1} parent=31 // pred_fallthru
          _
      $region32: #{tpu_custom_call.1} parent=5 // pred_fallthru
        _
      %p987 = scmp.le.s32.totalorder 2, %s12
      // Predicated region
      $region37: #{tpu_custom_call.1} parent=5 // pred_check
        %p988 = pneg %p987
      $region38: #{tpu_custom_call.1} parent=5 // pred_check_branch
        %990 = sbr.rel (%p988) target = $region40
      $region39: #{tpu_custom_call.1} parent=5 // pred_region
        %s991 = ssub.s32 %s12, 2
        // Predicated region
        $region41: #{tpu_custom_call.1} parent=39 // pred_check
          %p992 = pneg %p150
        $region42: #{tpu_custom_call.1} parent=39 // pred_check_branch
          %994 = sbr.rel (%p992) target = $region44
        $region43: #{tpu_custom_call.1} parent=39 // pred_region
          %s995 = sand.u32 %s135, 1
          %s996 = scalar_lea.sflag [#allocation3], %s995
          %s997 = sand.u32 %s135, 1
          %s998 = smul.addr %s997, 128
          %s999 = scalar_lea.vmem [#allocation2], %s998
          %1000 = dma.done %s996, 2048
        $region44: #{tpu_custom_call.1} parent=39 // pred_fallthru
          _
      $region40: #{tpu_custom_call.1} parent=5 // pred_fallthru
        _
    $region6: #{tpu_custom_call.1} parent=1 // loop_footer
      %s16 = sadd.s32 1, %s12
    $region7: #{tpu_custom_call.1} parent=1 // loop_footer_branch
      %11 = sbr.rel target = $region3
    $region8: #{tpu_custom_call.1} parent=1 // loop_exit
      _
    %1001 = vsyncpa [#allocation3], 1
    %s1002 = scalar_lea.sflag [#allocation3], 1
    %1003 = vsyncpa %s1002, 1

</llo_original>
